<compile_context>
chip_gen: v7x
topology: tpu7x:2x2x1
jax: 0.10.0
libtpu: 0.0.40
codegen_flags: <defaults>
</compile_context>

<pallas_src>
import jax
import jax.numpy as jnp
from jax.experimental import pallas as pl
from jax.experimental.pallas import tpu as pltpu


def residual_pointwise_conv_kernel(x_ref, w_ref, b_ref, o_ref):
    # x_ref/o_ref: (TILE_N, C, TILE_L); w_ref: (C, C) = W + I; b_ref: (C, 1)
    w = w_ref[...]
    b = b_ref[...]
    tile_n = x_ref.shape[0]  # static (block shape) -> trace-time unroll
    for n in range(tile_n):
        x = x_ref[n]                                                   # (C, TILE_L)
        # Pointwise conv (+ residual, folded into W) on the MXU, f32 accumulate.
        y = jnp.dot(w, x, preferred_element_type=jnp.float32)          # (C, TILE_L)
        o_ref[n] = (y + b).astype(o_ref.dtype)                         # lane-dense store


def _largest_divisor_leq(n, cap):
    d = max(1, min(n, cap))
    while n % d != 0:
        d -= 1
    return d


def _choose_tiles(N, C, L, itemsize, block_bytes, max_tile_n=8):
    """Pick (tile_n, tile_l) so tile_n*C*tile_l*itemsize ~= block_bytes.

    Prefers tile_l = L (one contiguous slab per batch row), folding batch rows
    into the block to fill the budget; otherwise splits L at a multiple of 128.
    """
    lane_budget = max(128, block_bytes // (C * itemsize))   # tile_n * tile_l cap
    l128 = ((L + 127) // 128) * 128                          # L padded to lanes
    if l128 <= lane_budget:
        tile_l = l128
        tile_n = _largest_divisor_leq(N, min(max_tile_n, lane_budget // tile_l))
    else:
        tile_n = 1
        tile_l = (lane_budget // 128) * 128

    # Keep >= 2 grid steps when possible so v7x megacore can split the work.
    grid_steps = (N // tile_n) * (-(-L // tile_l))
    if grid_steps == 1:
        if N >= 2:
            tile_n = _largest_divisor_leq(N, max(1, N // 2))
        elif tile_l >= 256:
            tile_l = max(128, ((tile_l // 2) // 128) * 128)
    return tile_n, tile_l


def residual_forward(x_ncl, w_cout_cin, bias, block_bytes=2 << 20):
    """out[n, co, l] = x[n, co, l] + sum_ci w[co, ci] * x[n, ci, l] + b[co]."""
    N, C, L = x_ncl.shape
    if w_cout_cin.ndim == 3:              # accept PyTorch Conv1d weight (C, C, 1)
        w_cout_cin = w_cout_cin[..., 0]
    itemsize = jnp.dtype(x_ncl.dtype).itemsize

    tile_n, tile_l = _choose_tiles(N, C, L, itemsize, block_bytes)

    # Pad L to a tile multiple (padding contributes only `b` there; sliced off).
    l_pad = (-(-L // tile_l)) * tile_l
    x_p = x_ncl if l_pad == L else jnp.pad(x_ncl, ((0, 0), (0, 0), (0, l_pad - L)))

    # Fold the residual identity into the weight: out = (W + I) @ x + b.
    w_res = w_cout_cin + jnp.eye(C, dtype=w_cout_cin.dtype)
    b2 = bias.reshape(C, 1)

    grid = (N // tile_n, l_pad // tile_l)
    out = pl.pallas_call(
        residual_pointwise_conv_kernel,
        out_shape=jax.ShapeDtypeStruct((N, C, l_pad), x_ncl.dtype),
        grid=grid,
        in_specs=[
            pl.BlockSpec((tile_n, C, tile_l), lambda n, l: (n, 0, l)),  # x block
            pl.BlockSpec((C, C), lambda n, l: (0, 0)),                  # W+I (constant)
            pl.BlockSpec((C, 1), lambda n, l: (0, 0)),                  # bias (constant)
        ],
        out_specs=pl.BlockSpec((tile_n, C, tile_l), lambda n, l: (n, 0, l)),
        compiler_params=pltpu.CompilerParams(
            # Both grid axes are fully independent -> megacore-shardable.
            # Default scoped VMEM is plenty for 2 MiB blocks; pass
            # vmem_limit_bytes here if `block_bytes` is raised for v6e/v7x.
            dimension_semantics=("parallel", "parallel"),
        ),
        cost_estimate=pl.CostEstimate(
            flops=2 * N * C * C * l_pad,
            transcendentals=0,
            bytes_accessed=2 * N * C * l_pad * itemsize,
        ),
    )(x_p, w_res, b2)

    return out if l_pad == L else out[:, :, :L]


if __name__ == "__main__":
    key = jax.random.PRNGKey(0)
    k_x, k_w, k_b = jax.random.split(key, 3)

    # Small shapes; L=200 (not a multiple of 128) exercises the padding path,
    # N=4 exercises the batch-folded block + megacore (>=2 grid steps) path.
    N, C, L = 4, 32, 200
    x = jax.random.normal(k_x, (N, C, L), dtype=jnp.float32)

    # Deterministic Conv1d(C, C, kernel_size=1) parameters.
    # PyTorch weight shape is (C_out, C_in, 1); stored squeezed as (C_out, C_in).
    fan_in = C  # C_in * kernel_size
    bound = 1.0 / (fan_in ** 0.5)
    w = jax.random.uniform(k_w, (C, C), minval=-bound, maxval=bound, dtype=jnp.float32)
    b = jax.random.uniform(k_b, (C,), minval=-bound, maxval=bound, dtype=jnp.float32)

    out = residual_forward(x, w, b)
    out = jax.block_until_ready(out)

    # Reference in plain JAX: x + Conv1d_1x1(x)
    ref = x + jnp.einsum("oc,ncl->nol", w, x) + b[None, :, None]
    assert out.shape == x.shape
    assert jnp.allclose(out, ref, atol=1e-5, rtol=1e-5)

    print("KERNEL_OK")
</pallas_src>

<mosaic_0001>
module attributes {stable_mosaic.version = 11 : i64} {
  func.func @residual_pointwise_conv_kernel(%arg0: i32, %arg1: i32, %arg2: memref<2x32x256xf32, #tpu.memory_space<vmem>>, %arg3: memref<32x32xf32, #tpu.memory_space<vmem>>, %arg4: memref<32x1xf32, #tpu.memory_space<vmem>>, %arg5: memref<2x32x256xf32, #tpu.memory_space<vmem>>) attributes {dimension_semantics = [#tpu.dimension_semantics<parallel>, #tpu.dimension_semantics<parallel>], iteration_bounds = array<i64: 2, 1>, scalar_prefetch = 0 : i64, scratch_operands = 0 : i64, tpu.core_type = #tpu.core_type<tc>, window_params = [{transform_indices = @transform_0, window_bounds = array<i64: 2, 32, 256>}, {pipeline_mode = #tpu.pipeline_mode<synchronous>, transform_indices = @transform_1, window_bounds = array<i64: 32, 32>}, {pipeline_mode = #tpu.pipeline_mode<synchronous>, transform_indices = @transform_2, window_bounds = array<i64: 32, 1>}, {transform_indices = @transform_3, window_bounds = array<i64: 2, 32, 256>}]} {
    %c0 = arith.constant 0 : index
    %c0_0 = arith.constant 0 : index
    %0 = vector.load %arg3[%c0, %c0_0] : memref<32x32xf32, #tpu.memory_space<vmem>>, vector<32x32xf32>
    %c0_1 = arith.constant 0 : index
    %c0_2 = arith.constant 0 : index
    %1 = vector.load %arg4[%c0_1, %c0_2] : memref<32x1xf32, #tpu.memory_space<vmem>>, vector<32x1xf32>
    %c0_3 = arith.constant 0 : index
    %c0_4 = arith.constant 0 : index
    %c0_5 = arith.constant 0 : index
    %2 = vector.load %arg2[%c0_3, %c0_4, %c0_5] : memref<2x32x256xf32, #tpu.memory_space<vmem>>, vector<1x32x256xf32>
    %3 = vector.shape_cast %2 : vector<1x32x256xf32> to vector<32x256xf32>
    %cst = arith.constant dense<0.000000e+00> : vector<32x256xf32>
    %4 = tpu.matmul %0, %3, %cst {dimension_numbers = #tpu.dot_dimension_numbers<[1], [0], [0], [1], [0, 0, 1, 1], [], []>} : vector<32x32xf32>, vector<32x256xf32>, vector<32x256xf32> -> vector<32x256xf32>
    %5 = vector.broadcast %1 : vector<32x1xf32> to vector<32x256xf32>
    %6 = arith.addf %4, %5 : vector<32x256xf32>
    %c0_6 = arith.constant 0 : index
    %c0_7 = arith.constant 0 : index
    %c0_8 = arith.constant 0 : index
    %7 = vector.load %arg5[%c0_6, %c0_7, %c0_8] : memref<2x32x256xf32, #tpu.memory_space<vmem>>, vector<1x32x256xf32>
    %8 = vector.shape_cast %7 : vector<1x32x256xf32> to vector<32x256xf32>
    %9 = vector.shape_cast %6 : vector<32x256xf32> to vector<1x32x256xf32>
    tpu.vector_store %arg5[%c0_6, %c0_7, %c0_8], %9 {strides = array<i32>} : memref<2x32x256xf32, #tpu.memory_space<vmem>>, vector<1x32x256xf32>,
    %c1 = arith.constant 1 : index
    %c0_9 = arith.constant 0 : index
    %c0_10 = arith.constant 0 : index
    %10 = vector.load %arg2[%c1, %c0_9, %c0_10] : memref<2x32x256xf32, #tpu.memory_space<vmem>>, vector<1x32x256xf32>
    %11 = vector.shape_cast %10 : vector<1x32x256xf32> to vector<32x256xf32>
    %cst_11 = arith.constant dense<0.000000e+00> : vector<32x256xf32>
    %12 = tpu.matmul %0, %11, %cst_11 {dimension_numbers = #tpu.dot_dimension_numbers<[1], [0], [0], [1], [0, 0, 1, 1], [], []>} : vector<32x32xf32>, vector<32x256xf32>, vector<32x256xf32> -> vector<32x256xf32>
    %13 = vector.broadcast %1 : vector<32x1xf32> to vector<32x256xf32>
    %14 = arith.addf %12, %13 : vector<32x256xf32>
    %c1_12 = arith.constant 1 : index
    %c0_13 = arith.constant 0 : index
    %c0_14 = arith.constant 0 : index
    %15 = vector.load %arg5[%c1_12, %c0_13, %c0_14] : memref<2x32x256xf32, #tpu.memory_space<vmem>>, vector<1x32x256xf32>
    %16 = vector.shape_cast %15 : vector<1x32x256xf32> to vector<32x256xf32>
    %17 = vector.shape_cast %14 : vector<32x256xf32> to vector<1x32x256xf32>
    tpu.vector_store %arg5[%c1_12, %c0_13, %c0_14], %17 {strides = array<i32>} : memref<2x32x256xf32, #tpu.memory_space<vmem>>, vector<1x32x256xf32>,
    return
  }
  func.func @transform_0(%arg0: i32, %arg1: i32) -> (i32, i32, i32) {
    %c0_i32 = arith.constant 0 : i32
    %c0_i32_0 = arith.constant 0 : i32
    return %arg0, %c0_i32, %arg1 : i32, i32, i32
  }
  func.func @transform_1(%arg0: i32, %arg1: i32) -> (i32, i32) {
    %c0_i32 = arith.constant 0 : i32
    %c0_i32_0 = arith.constant 0 : i32
    %c0_i32_1 = arith.constant 0 : i32
    return %c0_i32, %c0_i32_0 : i32, i32
  }
  func.func @transform_2(%arg0: i32, %arg1: i32) -> (i32, i32) {
    %c0_i32 = arith.constant 0 : i32
    %c0_i32_0 = arith.constant 0 : i32
    %c0_i32_1 = arith.constant 0 : i32
    return %c0_i32, %c0_i32_0 : i32, i32
  }
  func.func @transform_3(%arg0: i32, %arg1: i32) -> (i32, i32, i32) {
    %c0_i32 = arith.constant 0 : i32
    %c0_i32_0 = arith.constant 0 : i32
    return %arg0, %c0_i32, %arg1 : i32, i32, i32
  }
}

</mosaic_0001>

<llo_original>
// kernel: tpu_custom_call.1
$region0: #{tpu_custom_call.1}
  #allocation0 [shape = 'u32[]', space=smem, size = 0x4, offset = 0x4, fixed_abs, tag = 'smem constant byte address 0x4 - core index']
  #allocation1 [shape = 'u32[144,128]{1,0:T(1,128)}', space=vmem, size = 0x12000, scoped, tag = 'internal scratch']
  %s0 = inlined_call_operand.hbm [shape: f32[4,32,256], index: 0, kind: input, shape index: {}]
  %s1 = inlined_call_operand.vmem [shape: f32[32,32], index: 1, kind: input, shape index: {}]
  %s2 = inlined_call_operand.vmem [shape: f32[32,1], index: 2, kind: input, shape index: {}]
  %s3 = inlined_call_operand.hbm [shape: f32[4,32,256], index: 3, kind: output, shape index: {}]
  %s4 = sld [smem:[#allocation0]]
  $region49: #{tpu_custom_call.1} parent=0
    _
  %s6 = ssub.s32 1, %s4
  %s7 = scalar_select 0, %s6, %s4
  $region1: #{tpu_custom_call.1} parent=0
    #allocation2 [shape = 'u8[131072]{0}', space=vmem, size = 0x20000, scoped, tag = 'input window, operand 0']
    #allocation3 [shape = 's32[2]{0}', space=sflag, size = 0x8, scoped, tag = 'scoped memory for tpu_custom_call.1']
    #allocation4 [shape = 's32[2]{0}', space=sflag, size = 0x8, scoped, tag = 'scoped memory for tpu_custom_call.1']
    #allocation5 [shape = 'u8[131072]{0}', space=vmem, size = 0x20000, scoped, tag = 'output window, operand 0']
    %8 = vsyncpa [#allocation3], 0
    %s9 = scalar_lea.sflag [#allocation3], 1
    %10 = vsyncpa %s9, 0
    %11 = vsyncpa [#allocation4], 0
    %s12 = scalar_lea.sflag [#allocation4], 1
    %13 = vsyncpa %s12, 0
    loop: start=0, step=1, limit=4
    $region2: #{tpu_custom_call.1} parent=1 // loop_pre_header
      _
    $region3: #{tpu_custom_call.1} parent=1 // loop_header
      %s15 = sphi 0, %s19
      %p16 = scmp.ge.s32.totalorder %s15, 4
      %s22 = sphi 0, %s34
      %s23 = sphi 0, %s30
      %s24 = sphi 0, %s22
      %s25 = sphi 0, %s23
      %s26 = sphi 0, %s24
      %s27 = sphi 0, %s25
      %s39 = sphi 0, %s41
      %s42 = sphi 0, %s39
      %s43 = sphi 0, %s42
      %s59 = sphi 0, %s43
      %s63 = sphi 0, %s63
      %s65 = sphi 0, %s63
      %s66 = sphi 0, %s65
      %s80 = sphi 0, %s66
      %s84 = sphi 0, %s84
      %s86 = sphi 0, %s84
      %s87 = sphi 0, %s86
      %s101 = sphi 0, %s87
      %s109 = sphi 0, %s111
      %s112 = sphi 0, %s109
      %s113 = sphi 0, %s112
      %s129 = sphi 0, %s113
    $region4: #{tpu_custom_call.1} parent=1 // loop_header_branch
      %18 = sbr.rel (%p16) target = $region8
    $region5: #{tpu_custom_call.1} parent=1 // loop_body
      %s20 = ssub.s32 %s15, 1
      %s21 = ssub.s32 %s15, 2
      %s28 = sadd.s32 1, %s23
      %p29 = scmp.ge.s32.totalorder %s28, 1
      %s30 = scalar_select %p29, 0, %s28
      %s31 = sadd.s32 1, %s22
      %s32 = scalar_select %p29, %s31, %s22
      %p33 = scmp.ge.s32.totalorder %s32, 2
      %s34 = scalar_select %p33, 0, %s32
      %s35 = ssub.s32 %s22, %s34
      %s36 = ssub.s32 %s23, %s30
      %s37 = sor.u32 %s35, %s36
      %p38 = scmp.eq.s32.totalorder %s37, 0
      %s40 = sadd.s32 %s39, 1
      %s41 = scalar_select %p38, %s39, %s40
      %p44 = pneg %p38
      %p45 = scmp.eq.s32.totalorder %s15, 1
      %p46 = por %p44, %p45
      %p47 = scmp.ne.s32.totalorder %s39, %s42
      %p48 = scmp.eq.s32.totalorder %s15, 0
      %p49 = por %p47, %p48
      %p50 = scmp.ne.s32.totalorder %s39, %s42
      %p51 = scmp.eq.s32.totalorder %s20, 1
      %p52 = por %p50, %p51
      %p53 = scmp.ne.s32.totalorder %s42, %s43
      %p54 = scmp.eq.s32.totalorder %s20, 0
      %p55 = por %p53, %p54
      %p56 = scmp.ne.s32.totalorder %s42, %s43
      %p57 = scmp.eq.s32.totalorder %s21, 1
      %p58 = por %p56, %p57
      %p60 = scmp.ne.s32.totalorder %s43, %s59
      %p61 = scmp.eq.s32.totalorder %s21, 0
      %p62 = por %p60, %p61
      %s64 = sadd.s32 %s63, 1
      %p67 = scmp.eq.s32.totalorder %s15, 1
      %p68 = scmp.ne.s32.totalorder %s63, %s65
      %p69 = scmp.eq.s32.totalorder %s15, 0
      %p70 = por %p68, %p69
      %p71 = scmp.ne.s32.totalorder %s63, %s65
      %p72 = scmp.eq.s32.totalorder %s20, 1
      %p73 = por %p71, %p72
      %p74 = scmp.ne.s32.totalorder %s65, %s66
      %p75 = scmp.eq.s32.totalorder %s20, 0
      %p76 = por %p74, %p75
      %p77 = scmp.ne.s32.totalorder %s65, %s66
      %p78 = scmp.eq.s32.totalorder %s21, 1
      %p79 = por %p77, %p78
      %p81 = scmp.ne.s32.totalorder %s66, %s80
      %p82 = scmp.eq.s32.totalorder %s21, 0
      %p83 = por %p81, %p82
      %s85 = sadd.s32 %s84, 1
      %p88 = scmp.eq.s32.totalorder %s15, 1
      %p89 = scmp.ne.s32.totalorder %s84, %s86
      %p90 = scmp.eq.s32.totalorder %s15, 0
      %p91 = por %p89, %p90
      %p92 = scmp.ne.s32.totalorder %s84, %s86
      %p93 = scmp.eq.s32.totalorder %s20, 1
      %p94 = por %p92, %p93
      %p95 = scmp.ne.s32.totalorder %s86, %s87
      %p96 = scmp.eq.s32.totalorder %s20, 0
      %p97 = por %p95, %p96
      %p98 = scmp.ne.s32.totalorder %s86, %s87
      %p99 = scmp.eq.s32.totalorder %s21, 1
      %p100 = por %p98, %p99
      %p102 = scmp.ne.s32.totalorder %s87, %s101
      %p103 = scmp.eq.s32.totalorder %s21, 0
      %p104 = por %p102, %p103
      %s105 = ssub.s32 %s22, %s34
      %s106 = ssub.s32 %s23, %s30
      %s107 = sor.u32 %s105, %s106
      %p108 = scmp.eq.s32.totalorder %s107, 0
      %s110 = sadd.s32 %s109, 1
      %s111 = scalar_select %p108, %s109, %s110
      %p114 = pneg %p108
      %p115 = scmp.eq.s32.totalorder %s15, 1
      %p116 = por %p114, %p115
      %p117 = scmp.ne.s32.totalorder %s109, %s112
      %p118 = scmp.eq.s32.totalorder %s15, 0
      %p119 = por %p117, %p118
      %p120 = scmp.ne.s32.totalorder %s109, %s112
      %p121 = scmp.eq.s32.totalorder %s20, 1
      %p122 = por %p120, %p121
      %p123 = scmp.ne.s32.totalorder %s112, %s113
      %p124 = scmp.eq.s32.totalorder %s20, 0
      %p125 = por %p123, %p124
      %p126 = scmp.ne.s32.totalorder %s112, %s113
      %p127 = scmp.eq.s32.totalorder %s21, 1
      %p128 = por %p126, %p127
      %p130 = scmp.ne.s32.totalorder %s113, %s129
      %p131 = scmp.eq.s32.totalorder %s21, 0
      %p132 = por %p130, %p131
      %p133 = scmp.le.s32.totalorder 1, %s15
      %p134 = scmp.lt.s32.totalorder %s15, 3
      %p135 = pnand %p133, %p134
      %p136 = pneg %p135
      // Predicated region
      $region9: #{tpu_custom_call.1} parent=5 // pred_check
        _
      $region10: #{tpu_custom_call.1} parent=5 // pred_check_branch
        %138 = sbr.rel (%p135) target = $region12
      $region11: #{tpu_custom_call.1} parent=5 // pred_region
        %s139 = ssub.s32 %s15, 1
        // Predicated region
        $region13: #{tpu_custom_call.1} parent=11 // pred_check
          %p140 = pneg %p76
        $region14: #{tpu_custom_call.1} parent=11 // pred_check_branch
          %142 = sbr.rel (%p140) target = $region16
        $region15: #{tpu_custom_call.1} parent=11 // pred_region
          _
        $region16: #{tpu_custom_call.1} parent=11 // pred_fallthru
          _
        // Predicated region
        $region17: #{tpu_custom_call.1} parent=11 // pred_check
          %p143 = pneg %p97
        $region18: #{tpu_custom_call.1} parent=11 // pred_check_branch
          %145 = sbr.rel (%p143) target = $region20
        $region19: #{tpu_custom_call.1} parent=11 // pred_region
          _
        $region20: #{tpu_custom_call.1} parent=11 // pred_fallthru
          _
      $region12: #{tpu_custom_call.1} parent=5 // pred_fallthru
        _
      %p146 = scmp.lt.s32.totalorder %s15, 2
      // Predicated region
      $region21: #{tpu_custom_call.1} parent=5 // pred_check
        %p147 = pneg %p146
      $region22: #{tpu_custom_call.1} parent=5 // pred_check_branch
        %149 = sbr.rel (%p147) target = $region24
      $region23: #{tpu_custom_call.1} parent=5 // pred_region
        // Predicated region
        $region25: #{tpu_custom_call.1} parent=23 // pred_check
          %p150 = pneg %p49
        $region26: #{tpu_custom_call.1} parent=23 // pred_check_branch
          %152 = sbr.rel (%p150) target = $region28
        $region27: #{tpu_custom_call.1} parent=23 // pred_region
          %s153 = sand.u32 %s39, 1
          %s154 = scalar_lea.sflag [#allocation3], %s153
          %s155 = sand.u32 %s39, 1
          %s156 = smul.addr %s155, 128
          %s157 = scalar_lea.vmem [#allocation2], %s156
          %s158 = smul.u32 2, %s22
          %s159 = smul.u32 2, %s23
          %s161 = ssub.s32 2048, 2048
          %162 = vsyncadd %s154, %s161
          %s163 = smul.addr %s158, 8
          %s164 = sadd.s32 %s159, %s163
          %s165 = smul.addr %s164, 128
          %s166 = scalar_lea.hbm %s0, %s165
          %s167 = sshll.u32 %s157, 4
          %s168 = int_to_ptr.vmem [resolvable:$true] %s167
          %173 = dma.hbm_to_vmem [thread:$0]  %s166, 2048, %s168, %s154, 256, 256, 16
        $region28: #{tpu_custom_call.1} parent=23 // pred_fallthru
          _
      $region24: #{tpu_custom_call.1} parent=5 // pred_fallthru
        _
      %p174 = scmp.le.s32.totalorder 1, %s15
      %p175 = scmp.lt.s32.totalorder %s15, 3
      %p176 = pnand %p174, %p175
      %p177 = pneg %p176
      // Predicated region
      $region29: #{tpu_custom_call.1} parent=5 // pred_check
        _
      $region30: #{tpu_custom_call.1} parent=5 // pred_check_branch
        %179 = sbr.rel (%p176) target = $region32
      $region31: #{tpu_custom_call.1} parent=5 // pred_region
        %s180 = ssub.s32 %s15, 1
        %s181 = sand.u32 %s42, 1
        %s182 = scalar_lea.sflag [#allocation3], %s181
        %s183 = sand.u32 %s42, 1
        %s184 = smul.addr %s183, 128
        %s185 = scalar_lea.vmem [#allocation2], %s184
        // Predicated region
        $region33: #{tpu_custom_call.1} parent=31 // pred_check
          %p186 = pneg %p55
        $region34: #{tpu_custom_call.1} parent=31 // pred_check_branch
          %188 = sbr.rel (%p186) target = $region36
        $region35: #{tpu_custom_call.1} parent=31 // pred_region
          %189 = dma.done %s182, 2048
        $region36: #{tpu_custom_call.1} parent=31 // pred_fallthru
          _
        %s190 = sand.u32 %s42, 1
        %s191 = scalar_lea.sflag [#allocation3], %s190
        %s192 = sand.u32 %s42, 1
        %s193 = smul.addr %s192, 128
        %s194 = scalar_lea.vmem [#allocation2], %s193
        %p195 = pneg %p55
        %p196 = pneg %p52
        %p197 = pneg %p76
        %p198 = pneg %p73
        %p199 = pneg %p97
        %p200 = pneg %p94
        %p201 = pneg %p125
        %p202 = pneg %p122
        %s203 = sand.u32 %s112, 1
        %s204 = scalar_lea.sflag [#allocation4], %s203
        %s205 = sand.u32 %s112, 1
        %s206 = smul.addr %s205, 128
        %s207 = scalar_lea.vmem [#allocation5], %s206
        %s208 = smul.u32 2, %s24
        %s209 = smul.u32 2, %s25
        %s210 = smul.u32 2, %s24
        %s211 = smul.u32 2, %s25
        %v212 = vld [vmem:[%s1] sm:$0xff]
        %v213 = vld [vmem:[%s1 + $0x8] sm:$0xff]
        %v214 = vld [vmem:[%s1 + $0x10] sm:$0xff]
        %v215 = vld [vmem:[%s1 + $0x18] sm:$0xff]
        %v216 = vld [vmem:[%s2] sm:$0xff]
        %v217 = vld [vmem:[%s2 + $0x8] sm:$0xff]
        %v218 = vld [vmem:[%s2 + $0x10] sm:$0xff]
        %v219 = vld [vmem:[%s2 + $0x18] sm:$0xff]
        %v220 = vld [vmem:[%s185] sm:$0xff]
        %v221 = vld [vmem:[%s185 + $0x8] sm:$0xff]
        %v222 = vld [vmem:[%s185 + $0x10] sm:$0xff]
        %v223 = vld [vmem:[%s185 + $0x18] sm:$0xff]
        %v224 = vld [vmem:[%s185 + $0x20] sm:$0xff]
        %v225 = vld [vmem:[%s185 + $0x28] sm:$0xff]
        %v226 = vld [vmem:[%s185 + $0x30] sm:$0xff]
        %v227 = vld [vmem:[%s185 + $0x38] sm:$0xff]
        %229 = vset.pattern.permute.xlu0 0
        %230 = vperm.xlu0 %229, %v216
        %v231 = vpop.permute.xlu0 %230
        %234 = vset.pattern.permute.xlu0 0
        %235 = vperm.xlu0 %234, %v217
        %v236 = vpop.permute.xlu0 %235
        %239 = vset.pattern.permute.xlu0 0
        %240 = vperm.xlu0 %239, %v218
        %v241 = vpop.permute.xlu0 %240
        %244 = vset.pattern.permute.xlu0 0
        %245 = vperm.xlu0 %244, %v219
        %v246 = vpop.permute.xlu0 %245
        %vm248 = vcmask 261120
        %v250 = vsel %vm248, %v212, 0
        %v253 = vsel %vm248, %v213, 0
        %v256 = vsel %vm248, %v214, 0
        %v259 = vsel %vm248, %v215, 0
        %261 = vmatprep.subr.mxu0 %v221
        %262 = vmatpush1.msra.mxu0 %v220
        %263 = vmatprep.subr.mxu0 %v223
        %264 = vmatpush1.msra.mxu0 %v222
        %265 = vmatprep.subr.mxu0 %v225
        %266 = vmatpush1.msra.mxu0 %v224
        %267 = vmatprep.subr.mxu0 %v227
        %268 = vmatpush1.msra.mxu0 %v226
        %269 = vmatprep.subr.mxu0 0.0
        %270 = vmatpush1.msra.mxu0 0.0
        %271 = vmatprep.subr.mxu0 0.0
        %272 = vmatpush1.msra.mxu0 0.0
        %273 = vmatprep.subr.mxu0 0.0
        %274 = vmatpush1.msra.mxu0 0.0
        %275 = vmatprep.subr.mxu0 0.0
        %276 = vmatpush1.msra.mxu0 0.0
        %277 = vmatprep.subr.mxu0 0.0
        %278 = vmatpush1.msra.mxu0 0.0
        %279 = vmatprep.subr.mxu0 0.0
        %280 = vmatpush1.msra.mxu0 0.0
        %281 = vmatprep.subr.mxu0 0.0
        %282 = vmatpush1.msra.mxu0 0.0
        %283 = vmatprep.subr.mxu0 0.0
        %284 = vmatpush1.msra.mxu0 0.0
        %285 = vmatprep.subr.mxu0 0.0
        %286 = vmatpush1.msra.mxu0 0.0
        %287 = vmatprep.subr.mxu0 0.0
        %288 = vmatpush1.msra.mxu0 0.0
        %289 = vmatprep.subr.mxu0 0.0
        %290 = vmatpush1.msra.mxu0 0.0
        %291 = vmatprep.subr.mxu0 0.0
        %292 = vmatpush1.msra.mxu0 0.0
        %293 = vmatprep.subr.mxu0 0.0
        %294 = vmatpush1.msra.mxu0 0.0
        %295 = vmatprep.subr.mxu0 0.0
        %296 = vmatpush1.msra.mxu0 0.0
        %297 = vmatprep.subr.mxu0 0.0
        %298 = vmatpush1.msra.mxu0 0.0
        %299 = vmatprep.subr.mxu0 0.0
        %300 = vmatpush1.msra.mxu0 0.0
        %301 = vmatprep.subr.mxu0 0.0
        %302 = vmatpush1.msra.mxu0 0.0
        %303 = vmatprep.subr.mxu0 0.0
        %304 = vmatpush1.msra.mxu0 0.0
        %305 = vmatprep.subr.mxu0 0.0
        %306 = vmatpush1.msra.mxu0 0.0
        %307 = vmatprep.subr.mxu0 0.0
        %308 = vmatpush1.msra.mxu0 0.0
        %309 = vmatprep.subr.mxu0 0.0
        %310 = vmatpush1.msra.mxu0 0.0
        %311 = vmatprep.subr.mxu0 0.0
        %312 = vmatpush1.msra.mxu0 0.0
        %313 = vmatprep.subr.mxu0 0.0
        %314 = vmatpush1.msra.mxu0 0.0
        %315 = vmatprep.subr.mxu0 0.0
        %316 = vmatpush1.msra.mxu0 0.0
        %317 = vmatprep.subr.mxu0 0.0
        %318 = vmatpush1.msra.mxu0 0.0
        %319 = vmatprep.subr.mxu0 0.0
        %320 = vmatpush1.msra.mxu0 0.0
        %321 = vmatprep.subr.mxu0 0.0
        %322 = vmatpush1.msra.mxu0 0.0
        %323 = vmatprep.subr.mxu0 0.0
        %324 = vmatpush1.msra.mxu0 0.0
        %325 = vmatprep.mubr.f32.mxu0 0.0
        %326 = vmatmul.mubr.f32.gmra.mrb[0].mxu0 %v250
        %v327 = vpop.f32.mrb[0].mxu0
        %v328 = vadd.f32 %v231, %v327
        %v329 = vpop.f32.mrb[0].mxu0
        %v330 = vadd.f32 %v231, %v329
        %331 = vmatprep.mubr.f32.mxu0 0.0
        %332 = vmatmul.mubr.f32.gmra.mrb[0].mxu0 %v253
        %v333 = vpop.f32.mrb[0].mxu0
        %v334 = vadd.f32 %v236, %v333
        %v335 = vpop.f32.mrb[0].mxu0
        %v336 = vadd.f32 %v236, %v335
        %337 = vmatprep.mubr.f32.mxu0 0.0
        %338 = vmatmul.mubr.f32.gmra.mrb[0].mxu0 %v256
        %v339 = vpop.f32.mrb[0].mxu0
        %v340 = vadd.f32 %v241, %v339
        %v341 = vpop.f32.mrb[0].mxu0
        %v342 = vadd.f32 %v241, %v341
        %343 = vmatprep.mubr.f32.mxu0 0.0
        %344 = vmatmul.mubr.f32.gmra.mrb[0].mxu0 %v259
        %v345 = vpop.f32.mrb[0].mxu0
        %v346 = vadd.f32 %v246, %v345
        %v347 = vpop.f32.mrb[0].mxu0
        %v348 = vadd.f32 %v246, %v347
        %349 = vdwg.mxu0
        %350 = vst [vmem:[%s207] sm:$0xff] %v328
        %351 = vst [vmem:[%s207 + $0x8] sm:$0xff] %v330
        %352 = vst [vmem:[%s207 + $0x10] sm:$0xff] %v334
        %353 = vst [vmem:[%s207 + $0x18] sm:$0xff] %v336
        %354 = vst [vmem:[%s207 + $0x20] sm:$0xff] %v340
        %355 = vst [vmem:[%s207 + $0x28] sm:$0xff] %v342
        %356 = vst [vmem:[%s207 + $0x30] sm:$0xff] %v346
        %357 = vst [vmem:[%s207 + $0x38] sm:$0xff] %v348
        %s358 = scalar_lea.vmem %s185, 64 [#allocation2]
        %v359 = vld [vmem:[%s358] sm:$0xff]
        %v360 = vld [vmem:[%s358 + $0x8] sm:$0xff]
        %v361 = vld [vmem:[%s358 + $0x10] sm:$0xff]
        %v362 = vld [vmem:[%s358 + $0x18] sm:$0xff]
        %v363 = vld [vmem:[%s358 + $0x20] sm:$0xff]
        %v364 = vld [vmem:[%s358 + $0x28] sm:$0xff]
        %v365 = vld [vmem:[%s358 + $0x30] sm:$0xff]
        %v366 = vld [vmem:[%s358 + $0x38] sm:$0xff]
        %367 = vmatprep.subr.mxu0 %v360
        %368 = vmatpush1.msra.mxu0 %v359
        %369 = vmatprep.subr.mxu0 %v362
        %370 = vmatpush1.msra.mxu0 %v361
        %371 = vmatprep.subr.mxu0 %v364
        %372 = vmatpush1.msra.mxu0 %v363
        %373 = vmatprep.subr.mxu0 %v366
        %374 = vmatpush1.msra.mxu0 %v365
        %375 = vmatprep.subr.mxu0 0.0
        %376 = vmatpush1.msra.mxu0 0.0
        %377 = vmatprep.subr.mxu0 0.0
        %378 = vmatpush1.msra.mxu0 0.0
        %379 = vmatprep.subr.mxu0 0.0
        %380 = vmatpush1.msra.mxu0 0.0
        %381 = vmatprep.subr.mxu0 0.0
        %382 = vmatpush1.msra.mxu0 0.0
        %383 = vmatprep.subr.mxu0 0.0
        %384 = vmatpush1.msra.mxu0 0.0
        %385 = vmatprep.subr.mxu0 0.0
        %386 = vmatpush1.msra.mxu0 0.0
        %387 = vmatprep.subr.mxu0 0.0
        %388 = vmatpush1.msra.mxu0 0.0
        %389 = vmatprep.subr.mxu0 0.0
        %390 = vmatpush1.msra.mxu0 0.0
        %391 = vmatprep.subr.mxu0 0.0
        %392 = vmatpush1.msra.mxu0 0.0
        %393 = vmatprep.subr.mxu0 0.0
        %394 = vmatpush1.msra.mxu0 0.0
        %395 = vmatprep.subr.mxu0 0.0
        %396 = vmatpush1.msra.mxu0 0.0
        %397 = vmatprep.subr.mxu0 0.0
        %398 = vmatpush1.msra.mxu0 0.0
        %399 = vmatprep.subr.mxu0 0.0
        %400 = vmatpush1.msra.mxu0 0.0
        %401 = vmatprep.subr.mxu0 0.0
        %402 = vmatpush1.msra.mxu0 0.0
        %403 = vmatprep.subr.mxu0 0.0
        %404 = vmatpush1.msra.mxu0 0.0
        %405 = vmatprep.subr.mxu0 0.0
        %406 = vmatpush1.msra.mxu0 0.0
        %407 = vmatprep.subr.mxu0 0.0
        %408 = vmatpush1.msra.mxu0 0.0
        %409 = vmatprep.subr.mxu0 0.0
        %410 = vmatpush1.msra.mxu0 0.0
        %411 = vmatprep.subr.mxu0 0.0
        %412 = vmatpush1.msra.mxu0 0.0
        %413 = vmatprep.subr.mxu0 0.0
        %414 = vmatpush1.msra.mxu0 0.0
        %415 = vmatprep.subr.mxu0 0.0
        %416 = vmatpush1.msra.mxu0 0.0
        %417 = vmatprep.subr.mxu0 0.0
        %418 = vmatpush1.msra.mxu0 0.0
        %419 = vmatprep.subr.mxu0 0.0
        %420 = vmatpush1.msra.mxu0 0.0
        %421 = vmatprep.subr.mxu0 0.0
        %422 = vmatpush1.msra.mxu0 0.0
        %423 = vmatprep.subr.mxu0 0.0
        %424 = vmatpush1.msra.mxu0 0.0
        %425 = vmatprep.subr.mxu0 0.0
        %426 = vmatpush1.msra.mxu0 0.0
        %427 = vmatprep.subr.mxu0 0.0
        %428 = vmatpush1.msra.mxu0 0.0
        %429 = vmatprep.subr.mxu0 0.0
        %430 = vmatpush1.msra.mxu0 0.0
        %431 = vmatprep.mubr.f32.mxu0 0.0
        %432 = vmatmul.mubr.f32.gmra.mrb[0].mxu0 %v250
        %v433 = vpop.f32.mrb[0].mxu0
        %v434 = vadd.f32 %v231, %v433
        %v435 = vpop.f32.mrb[0].mxu0
        %v436 = vadd.f32 %v231, %v435
        %437 = vmatprep.mubr.f32.mxu0 0.0
        %438 = vmatmul.mubr.f32.gmra.mrb[0].mxu0 %v253
        %v439 = vpop.f32.mrb[0].mxu0
        %v440 = vadd.f32 %v236, %v439
        %v441 = vpop.f32.mrb[0].mxu0
        %v442 = vadd.f32 %v236, %v441
        %443 = vmatprep.mubr.f32.mxu0 0.0
        %444 = vmatmul.mubr.f32.gmra.mrb[0].mxu0 %v256
        %v445 = vpop.f32.mrb[0].mxu0
        %v446 = vadd.f32 %v241, %v445
        %v447 = vpop.f32.mrb[0].mxu0
        %v448 = vadd.f32 %v241, %v447
        %449 = vmatprep.mubr.f32.mxu0 0.0
        %450 = vmatmul.mubr.f32.gmra.mrb[0].mxu0 %v259
        %v451 = vpop.f32.mrb[0].mxu0
        %v452 = vadd.f32 %v246, %v451
        %v453 = vpop.f32.mrb[0].mxu0
        %v454 = vadd.f32 %v246, %v453
        %455 = vdwg.mxu0
        %s456 = scalar_lea.vmem %s207, 64 [#allocation5]
        %457 = vst [vmem:[%s456] sm:$0xff] %v434
        %458 = vst [vmem:[%s456 + $0x8] sm:$0xff] %v436
        %459 = vst [vmem:[%s456 + $0x10] sm:$0xff] %v440
        %460 = vst [vmem:[%s456 + $0x18] sm:$0xff] %v442
        %461 = vst [vmem:[%s456 + $0x20] sm:$0xff] %v446
        %462 = vst [vmem:[%s456 + $0x28] sm:$0xff] %v448
        %463 = vst [vmem:[%s456 + $0x30] sm:$0xff] %v452
        %464 = vst [vmem:[%s456 + $0x38] sm:$0xff] %v454
        %s465 = sand.u32 %s112, 1
        %s466 = scalar_lea.sflag [#allocation4], %s465
        %s467 = sand.u32 %s112, 1
        %s468 = smul.addr %s467, 128
        %s469 = scalar_lea.vmem [#allocation5], %s468
        // Predicated region
        $region37: #{tpu_custom_call.1} parent=31 // pred_check
          %p470 = pneg %p122
        $region38: #{tpu_custom_call.1} parent=31 // pred_check_branch
          %472 = sbr.rel (%p470) target = $region40
        $region39: #{tpu_custom_call.1} parent=31 // pred_region
          %s473 = smul.u32 2, %s24
          %s474 = smul.u32 2, %s25
          %s476 = ssub.s32 2048, 2048
          %477 = vsyncadd %s466, %s476
          %s478 = smul.addr %s473, 8
          %s479 = sadd.s32 %s474, %s478
          %s480 = smul.addr %s479, 128
          %s481 = scalar_lea.hbm %s3, %s480
          %s482 = sshll.u32 %s469, 4
          %s483 = int_to_ptr.vmem [resolvable:$true] %s482
          %488 = dma.vmem_to_hbm [thread:$0]  %s483, 2048, %s481, %s466, 256, 256, 16
        $region40: #{tpu_custom_call.1} parent=31 // pred_fallthru
          _
      $region32: #{tpu_custom_call.1} parent=5 // pred_fallthru
        _
      %p489 = scmp.le.s32.totalorder 2, %s15
      // Predicated region
      $region41: #{tpu_custom_call.1} parent=5 // pred_check
        %p490 = pneg %p489
      $region42: #{tpu_custom_call.1} parent=5 // pred_check_branch
        %492 = sbr.rel (%p490) target = $region44
      $region43: #{tpu_custom_call.1} parent=5 // pred_region
        %s493 = ssub.s32 %s15, 2
        // Predicated region
        $region45: #{tpu_custom_call.1} parent=43 // pred_check
          %p494 = pneg %p128
        $region46: #{tpu_custom_call.1} parent=43 // pred_check_branch
          %496 = sbr.rel (%p494) target = $region48
        $region47: #{tpu_custom_call.1} parent=43 // pred_region
          %s497 = sand.u32 %s113, 1
          %s498 = scalar_lea.sflag [#allocation4], %s497
          %s499 = sand.u32 %s113, 1
          %s500 = smul.addr %s499, 128
          %s501 = scalar_lea.vmem [#allocation5], %s500
          %502 = dma.done %s498, 2048
        $region48: #{tpu_custom_call.1} parent=43 // pred_fallthru
          _
      $region44: #{tpu_custom_call.1} parent=5 // pred_fallthru
        _
    $region6: #{tpu_custom_call.1} parent=1 // loop_footer
      %s19 = sadd.s32 1, %s15
    $region7: #{tpu_custom_call.1} parent=1 // loop_footer_branch
      %14 = sbr.rel target = $region3
    $region8: #{tpu_custom_call.1} parent=1 // loop_exit
      _
    %503 = vsyncpa [#allocation3], 1
    %s504 = scalar_lea.sflag [#allocation3], 1
    %505 = vsyncpa %s504, 1
    %506 = vsyncpa [#allocation4], 1
    %s507 = scalar_lea.sflag [#allocation4], 1
    %508 = vsyncpa %s507, 1

</llo_original>
